<compile_context>
chip_gen: v7x
topology: tpu7x:2x2x1
jax: 0.10.0
libtpu: 0.0.40
codegen_flags: <defaults>
</compile_context>

<pallas_src>
import jax
import jax.numpy as jnp
from jax import lax
from jax.experimental import pallas as pl
from jax.experimental.pallas import tpu as pltpu


def bottleneck_kernel(x_ref, w1_ref, b1_ref, w2_ref, b2_ref, w3_ref, b3_ref,
                      o_ref):
    # x_ref : (Nb, H, W*Cin)            lane-dense input block (channels fastest)
    # w1_ref: (W*Cin,   W*width)  bf16  block-diag 1x1 conv, BN1 scale folded in
    # w2_ref: (3*W*width, W*width) bf16 fused banded 3x3 conv (dy taps stacked on K)
    # w3_ref: (W*width, W*Cout)   bf16  block-diag 1x1 conv, BN3 scale folded in
    # b*_ref: (1, W*C)            f32   lane-dense folded BN biases
    # o_ref : (Nb, H, W*Cout)
    Nb, H, WCin = x_ref.shape
    WW = w1_ref.shape[1]          # W * width
    WCout = w3_ref.shape[1]
    M = Nb * H

    x = x_ref[...].reshape(M, WCin)              # f32, flattened M rows
    x_bf = x.astype(jnp.bfloat16)

    # ---- conv1 (1x1) + bn1 + relu : one bf16 MXU matmul, K = W*Cin ----
    h1 = jnp.dot(x_bf, w1_ref[...], preferred_element_type=jnp.float32)
    h1 = jnp.maximum(h1 + b1_ref[...], 0.0)      # (M, W*width) f32

    # ---- conv2 (3x3, stride=1, pad=1) + bn2 + relu : ONE fused matmul ----
    # dx taps + W zero-padding live inside the banded weights; dy taps are two
    # XLU sublane rolls of the flattened rows, zeroed at per-image H borders.
    # Boundary mask iota built once and reused for both taps.
    h_idx = lax.broadcasted_iota(jnp.int32, (Nb, H, WW), 1).reshape(M, WW)
    h1_up = jnp.where(h_idx >= 1,                       # row r-1 exists
                      pltpu.roll(h1, shift=1, axis=0), 0.0)
    h1_dn = jnp.where(h_idx <= H - 2,                   # row r+1 exists
                      pltpu.roll(h1, shift=M - 1, axis=0), 0.0)
    cat = jnp.concatenate([h1_up, h1, h1_dn], axis=1).astype(jnp.bfloat16)
    h2 = jnp.dot(cat, w2_ref[...], preferred_element_type=jnp.float32)
    h2 = jnp.maximum(h2 + b2_ref[...], 0.0)      # (M, W*width) f32

    # ---- conv3 (1x1) + bn3 ----
    h3 = jnp.dot(h2.astype(jnp.bfloat16), w3_ref[...],
                 preferred_element_type=jnp.float32)
    h3 = h3 + b3_ref[...]                        # (M, W*Cout) f32

    # ---- residual add (identity: downsample=None, Cin == Cout) + relu ----
    out = jnp.maximum(h3 + x, 0.0)
    o_ref[...] = out.reshape(Nb, H, WCout)


def bottleneck_forward(x_ld, w1_bd, b1_ld, w2_cat, b2_ld, w3_bd, b3_ld,
                       *, block_n=None):
    N, H, WCin = x_ld.shape
    WCout = w3_bd.shape[1]
    # Identity residual assumptions (stride=1, downsample=None, Cin == Cout).
    assert WCin == WCout, "identity residual requires inplanes == planes*expansion"

    # Pack batch images per grid step so matmuls get M = block_n*H rows
    # (target >= 128 MXU rows).  At N=2, H=16 the whole batch becomes a single
    # grid step; for larger N this keeps an even, parallel batch-block axis.
    if block_n is None:
        block_n = min(N, max(1, (128 + H - 1) // H))
        while N % block_n:
            block_n -= 1
    assert N % block_n == 0

    def const_spec(arr):
        zeros = (0,) * arr.ndim
        # Block index never changes -> weight tile DMA'd once with the
        # single-step grid used here.  For deep multi-step grids, add
        # pipeline_mode=pl.Buffered(1) (or hoist to scratch) to single-buffer.
        return pl.BlockSpec(arr.shape, lambda n, _z=zeros: _z)

    return pl.pallas_call(
        bottleneck_kernel,
        out_shape=jax.ShapeDtypeStruct((N, H, WCout), jnp.float32),
        grid_spec=pltpu.PrefetchScalarGridSpec(
            num_scalar_prefetch=0,
            grid=(N // block_n,),
            in_specs=[
                pl.BlockSpec((block_n, H, WCin), lambda n: (n, 0, 0)),
                const_spec(w1_bd), const_spec(b1_ld),
                const_spec(w2_cat), const_spec(b2_ld),
                const_spec(w3_bd), const_spec(b3_ld),
            ],
            out_specs=pl.BlockSpec((block_n, H, WCout), lambda n: (n, 0, 0)),
        ),
        compiler_params=pltpu.CompilerParams(
            dimension_semantics=("parallel",)),
    )(x_ld, w1_bd, b1_ld, w2_cat, b2_ld, w3_bd, b3_ld)


def prepare_params(conv1_w, conv2_w, conv3_w, s1, b1, s2, b2, s3, b3, W):
    """One-time (wrapper-side) weight transform to lane-dense / banded bf16 form."""
    width = conv1_w.shape[0]
    eye_w = jnp.eye(W, dtype=jnp.float32)

    # 1x1 convs: (O, I, 1, 1) -> (I, O), BN scale folded into output columns,
    # then block-diagonal over the W spatial positions (lane-dense layout).
    # NOTE: the kron trick only pays off at tiny channel counts like these
    # (Cin=16 < 128 lanes).  For realistic ResNet widths (Cin >= 128) drop the
    # kron and run conv1/conv3 as plain (M, Cin) x (Cin, width) matmuls -- the
    # kron'd weight scales O(W^2*Cin*width) and will not fit VMEM.
    m1 = conv1_w[:, :, 0, 0].T * s1[None, :]                 # (Cin,  width)
    m3 = conv3_w[:, :, 0, 0].T * s3[None, :]                 # (width, Cout)
    w1_bd = jnp.kron(eye_w, m1)                              # (W*Cin,  W*width)
    w3_bd = jnp.kron(eye_w, m3)                              # (W*width, W*Cout)

    # 3x3 conv: for each dy a banded (W*width, W*width) matrix whose
    # off-diagonal blocks encode the dx taps; out-of-range bands implement the
    # zero padding along W.  The three dy bands are stacked along K so conv2
    # becomes a single (3*W*width, W*width) matmul in the kernel.
    bands = []
    for ky in range(3):
        band = jnp.zeros((W * width, W * width), jnp.float32)
        for kx in range(3):
            a = conv2_w[:, :, ky, kx].T * s2[None, :]        # (c_in, c_out)
            band = band + jnp.kron(
                jnp.eye(W, k=-(kx - 1), dtype=jnp.float32), a)
        bands.append(band)
    w2_cat = jnp.concatenate(bands, axis=0)                  # (3*W*w, W*w)

    b1_ld = jnp.tile(b1, W).reshape(1, -1)
    b2_ld = jnp.tile(b2, W).reshape(1, -1)
    b3_ld = jnp.tile(b3, W).reshape(1, -1)

    # bf16 MXU operands (2x MXU throughput, half the weight bytes); biases and
    # all elementwise math stay f32.
    return (w1_bd.astype(jnp.bfloat16), b1_ld,
            w2_cat.astype(jnp.bfloat16), b2_ld,
            w3_bd.astype(jnp.bfloat16), b3_ld)


# ---------------- reference (plain JAX, f32) for correctness check ----------------
def ref_forward(x_nhwc, conv1_w, conv2_w, conv3_w, s1, b1, s2, b2, s3, b3):
    def conv(x, w_oihw, padding):
        return lax.conv_general_dilated(
            x, w_oihw, window_strides=(1, 1), padding=padding,
            dimension_numbers=("NHWC", "OIHW", "NHWC"))

    out = conv(x_nhwc, conv1_w, "VALID")
    out = jnp.maximum(out * s1 + b1, 0.0)
    out = conv(out, conv2_w, ((1, 1), (1, 1)))
    out = jnp.maximum(out * s2 + b2, 0.0)
    out = conv(out, conv3_w, "VALID")
    out = out * s3 + b3
    return jnp.maximum(out + x_nhwc, 0.0)


if __name__ == "__main__":
    key = jax.random.PRNGKey(0)
    keys = jax.random.split(key, 8)

    # Bottleneck(inplanes=16, planes=4): width=4, out_channels=16 (== inplanes)
    inplanes, planes, base_width = 16, 4, 64
    width = int(planes * (base_width / 64.0))   # 4
    Cout = planes * 4                           # 16
    N, H, W = 2, 16, 16
    eps = 1e-5

    # PyTorch-shaped conv weights (O, I, kh, kw)
    conv1_w = 0.1 * jax.random.normal(keys[0], (width, inplanes, 1, 1), jnp.float32)
    conv2_w = 0.1 * jax.random.normal(keys[1], (width, width, 3, 3), jnp.float32)
    conv3_w = 0.1 * jax.random.normal(keys[2], (Cout, width, 1, 1), jnp.float32)

    def bn_fold(k, c):
        kg, kb, km, kv = jax.random.split(k, 4)
        gamma = 1.0 + 0.1 * jax.random.normal(kg, (c,), jnp.float32)
        beta = 0.1 * jax.random.normal(kb, (c,), jnp.float32)
        mean = 0.1 * jax.random.normal(km, (c,), jnp.float32)
        var = jnp.abs(jax.random.normal(kv, (c,), jnp.float32)) + 0.5
        scale = gamma / jnp.sqrt(var + eps)
        bias = beta - mean * scale
        return scale, bias

    s1, b1 = bn_fold(keys[3], width)
    s2, b2 = bn_fold(keys[4], width)
    s3, b3 = bn_fold(keys[5], Cout)

    # Input in PyTorch NCHW convention -> NHWC -> lane-dense (N, H, W*Cin).
    x_nchw = jax.random.normal(keys[6], (N, inplanes, H, W), jnp.float32)
    x_nhwc = jnp.transpose(x_nchw, (0, 2, 3, 1))
    x_ld = x_nhwc.reshape(N, H, W * inplanes)   # free reshape of contiguous NHWC

    params = prepare_params(conv1_w, conv2_w, conv3_w,
                            s1, b1, s2, b2, s3, b3, W)

    out_ld = bottleneck_forward(x_ld, *params)
    out_ld = jax.block_until_ready(out_ld)
    out = out_ld.reshape(N, H, W, Cout)

    ref = ref_forward(x_nhwc, conv1_w, conv2_w, conv3_w,
                      s1, b1, s2, b2, s3, b3)
    ref = jax.block_until_ready(ref)

    assert out.shape == (N, H, W, Cout)
    err = jnp.max(jnp.abs(out - ref))
    # bf16 MXU operands (f32 accumulate) vs. f32 reference -> loosened tolerance.
    assert jnp.allclose(out, ref, rtol=5e-2, atol=5e-2), f"max abs err {err}"

    print("KERNEL_OK")
</pallas_src>

<mosaic_0001>
module attributes {stable_mosaic.version = 11 : i64} {
  func.func @bottleneck_kernel(%arg0: i32, %arg1: memref<2x16x256xf32, #tpu.memory_space<vmem>>, %arg2: memref<256x64xbf16, #tpu.memory_space<vmem>>, %arg3: memref<1x64xf32, #tpu.memory_space<vmem>>, %arg4: memref<192x64xbf16, #tpu.memory_space<vmem>>, %arg5: memref<1x64xf32, #tpu.memory_space<vmem>>, %arg6: memref<64x256xbf16, #tpu.memory_space<vmem>>, %arg7: memref<1x256xf32, #tpu.memory_space<vmem>>, %arg8: memref<2x16x256xf32, #tpu.memory_space<vmem>>) attributes {dimension_semantics = [#tpu.dimension_semantics<parallel>], iteration_bounds = array<i64: 1>, scalar_prefetch = 0 : i64, scratch_operands = 0 : i64, tpu.core_type = #tpu.core_type<tc>, window_params = [{transform_indices = @transform_0, window_bounds = array<i64: 2, 16, 256>}, {pipeline_mode = #tpu.pipeline_mode<synchronous>, transform_indices = @transform_1, window_bounds = array<i64: 256, 64>}, {pipeline_mode = #tpu.pipeline_mode<synchronous>, transform_indices = @transform_2, window_bounds = array<i64: 1, 64>}, {pipeline_mode = #tpu.pipeline_mode<synchronous>, transform_indices = @transform_3, window_bounds = array<i64: 192, 64>}, {pipeline_mode = #tpu.pipeline_mode<synchronous>, transform_indices = @transform_4, window_bounds = array<i64: 1, 64>}, {pipeline_mode = #tpu.pipeline_mode<synchronous>, transform_indices = @transform_5, window_bounds = array<i64: 64, 256>}, {pipeline_mode = #tpu.pipeline_mode<synchronous>, transform_indices = @transform_6, window_bounds = array<i64: 1, 256>}, {transform_indices = @transform_7, window_bounds = array<i64: 2, 16, 256>}]} {
    %c0 = arith.constant 0 : index
    %c0_0 = arith.constant 0 : index
    %c0_1 = arith.constant 0 : index
    %0 = vector.load %arg1[%c0, %c0_0, %c0_1] : memref<2x16x256xf32, #tpu.memory_space<vmem>>, vector<2x16x256xf32>
    %1 = vector.shape_cast %0 : vector<2x16x256xf32> to vector<32x256xf32>
    %2 = arith.truncf %1 : vector<32x256xf32> to vector<32x256xbf16>
    %c0_2 = arith.constant 0 : index
    %c0_3 = arith.constant 0 : index
    %3 = vector.load %arg2[%c0_2, %c0_3] : memref<256x64xbf16, #tpu.memory_space<vmem>>, vector<256x64xbf16>
    %cst = arith.constant dense<0.000000e+00> : vector<32x64xf32>
    %4 = tpu.matmul %2, %3, %cst {dimension_numbers = #tpu.dot_dimension_numbers<[1], [0], [0], [1], [0, 0, 1, 1], [], []>} : vector<32x256xbf16>, vector<256x64xbf16>, vector<32x64xf32> -> vector<32x64xf32>
    %c0_4 = arith.constant 0 : index
    %c0_5 = arith.constant 0 : index
    %5 = vector.load %arg3[%c0_4, %c0_5] : memref<1x64xf32, #tpu.memory_space<vmem>>, vector<1x64xf32>
    %6 = vector.broadcast %5 : vector<1x64xf32> to vector<32x64xf32>
    %7 = arith.addf %4, %6 : vector<32x64xf32>
    %cst_6 = arith.constant 0.000000e+00 : f32
    %8 = vector.broadcast %cst_6 : f32 to vector<32x64xf32>
    %9 = arith.maximumf %7, %8 : vector<32x64xf32>
    %10 = tpu.iota {dimensions = array<i32: 1>} : vector<2x16x64xi32>
    %11 = vector.shape_cast %10 : vector<2x16x64xi32> to vector<32x64xi32>
    %c1_i32 = arith.constant 1 : i32
    %12 = vector.broadcast %c1_i32 : i32 to vector<32x64xi32>
    %13 = arith.cmpi sge, %11, %12 : vector<32x64xi32>
    %c1_i32_7 = arith.constant 1 : i32
    %14 = tpu.dynamic_rotate %9 by %c1_i32_7 dim 0 : vector<32x64xf32>, i32 -> vector<32x64xf32>
    %cst_8 = arith.constant 0.000000e+00 : f32
    %15 = vector.broadcast %cst_8 : f32 to vector<32x64xf32>
    %16 = arith.select %13, %14, %15 : vector<32x64xi1>, vector<32x64xf32>
    %c14_i32 = arith.constant 14 : i32
    %17 = vector.broadcast %c14_i32 : i32 to vector<32x64xi32>
    %18 = arith.cmpi sle, %11, %17 : vector<32x64xi32>
    %c31_i32 = arith.constant 31 : i32
    %19 = tpu.dynamic_rotate %9 by %c31_i32 dim 0 : vector<32x64xf32>, i32 -> vector<32x64xf32>
    %cst_9 = arith.constant 0.000000e+00 : f32
    %20 = vector.broadcast %cst_9 : f32 to vector<32x64xf32>
    %21 = arith.select %18, %19, %20 : vector<32x64xi1>, vector<32x64xf32>
    %22 = tpu.concatenate %16, %9, %21 in 1 : vector<32x64xf32>, vector<32x64xf32>, vector<32x64xf32> -> vector<32x192xf32>
    %23 = arith.truncf %22 : vector<32x192xf32> to vector<32x192xbf16>
    %c0_10 = arith.constant 0 : index
    %c0_11 = arith.constant 0 : index
    %24 = vector.load %arg4[%c0_10, %c0_11] : memref<192x64xbf16, #tpu.memory_space<vmem>>, vector<192x64xbf16>
    %cst_12 = arith.constant dense<0.000000e+00> : vector<32x64xf32>
    %25 = tpu.matmul %23, %24, %cst_12 {dimension_numbers = #tpu.dot_dimension_numbers<[1], [0], [0], [1], [0, 0, 1, 1], [], []>} : vector<32x192xbf16>, vector<192x64xbf16>, vector<32x64xf32> -> vector<32x64xf32>
    %c0_13 = arith.constant 0 : index
    %c0_14 = arith.constant 0 : index
    %26 = vector.load %arg5[%c0_13, %c0_14] : memref<1x64xf32, #tpu.memory_space<vmem>>, vector<1x64xf32>
    %27 = vector.broadcast %26 : vector<1x64xf32> to vector<32x64xf32>
    %28 = arith.addf %25, %27 : vector<32x64xf32>
    %cst_15 = arith.constant 0.000000e+00 : f32
    %29 = vector.broadcast %cst_15 : f32 to vector<32x64xf32>
    %30 = arith.maximumf %28, %29 : vector<32x64xf32>
    %31 = arith.truncf %30 : vector<32x64xf32> to vector<32x64xbf16>
    %c0_16 = arith.constant 0 : index
    %c0_17 = arith.constant 0 : index
    %32 = vector.load %arg6[%c0_16, %c0_17] : memref<64x256xbf16, #tpu.memory_space<vmem>>, vector<64x256xbf16>
    %cst_18 = arith.constant dense<0.000000e+00> : vector<32x256xf32>
    %33 = tpu.matmul %31, %32, %cst_18 {dimension_numbers = #tpu.dot_dimension_numbers<[1], [0], [0], [1], [0, 0, 1, 1], [], []>} : vector<32x64xbf16>, vector<64x256xbf16>, vector<32x256xf32> -> vector<32x256xf32>
    %c0_19 = arith.constant 0 : index
    %c0_20 = arith.constant 0 : index
    %34 = vector.load %arg7[%c0_19, %c0_20] : memref<1x256xf32, #tpu.memory_space<vmem>>, vector<1x256xf32>
    %35 = vector.broadcast %34 : vector<1x256xf32> to vector<32x256xf32>
    %36 = arith.addf %33, %35 : vector<32x256xf32>
    %37 = arith.addf %36, %1 : vector<32x256xf32>
    %cst_21 = arith.constant 0.000000e+00 : f32
    %38 = vector.broadcast %cst_21 : f32 to vector<32x256xf32>
    %39 = arith.maximumf %37, %38 : vector<32x256xf32>
    %40 = vector.shape_cast %39 : vector<32x256xf32> to vector<2x16x256xf32>
    %c0_22 = arith.constant 0 : index
    %c0_23 = arith.constant 0 : index
    %c0_24 = arith.constant 0 : index
    %41 = vector.load %arg8[%c0_22, %c0_23, %c0_24] : memref<2x16x256xf32, #tpu.memory_space<vmem>>, vector<2x16x256xf32>
    tpu.vector_store %arg8[%c0_22, %c0_23, %c0_24], %40 {strides = array<i32>} : memref<2x16x256xf32, #tpu.memory_space<vmem>>, vector<2x16x256xf32>,
    return
  }
  func.func @transform_0(%arg0: i32) -> (i32, i32, i32) {
    %c0_i32 = arith.constant 0 : i32
    %c0_i32_0 = arith.constant 0 : i32
    %c0_i32_1 = arith.constant 0 : i32
    return %arg0, %c0_i32, %c0_i32_0 : i32, i32, i32
  }
  func.func @transform_1(%arg0: i32) -> (i32, i32) {
    %c0_i32 = arith.constant 0 : i32
    %c0_i32_0 = arith.constant 0 : i32
    %c0_i32_1 = arith.constant 0 : i32
    return %c0_i32, %c0_i32_0 : i32, i32
  }
  func.func @transform_2(%arg0: i32) -> (i32, i32) {
    %c0_i32 = arith.constant 0 : i32
    %c0_i32_0 = arith.constant 0 : i32
    %c0_i32_1 = arith.constant 0 : i32
    return %c0_i32, %c0_i32_0 : i32, i32
  }
  func.func @transform_3(%arg0: i32) -> (i32, i32) {
    %c0_i32 = arith.constant 0 : i32
    %c0_i32_0 = arith.constant 0 : i32
    %c0_i32_1 = arith.constant 0 : i32
    return %c0_i32, %c0_i32_0 : i32, i32
  }
  func.func @transform_4(%arg0: i32) -> (i32, i32) {
    %c0_i32 = arith.constant 0 : i32
    %c0_i32_0 = arith.constant 0 : i32
    %c0_i32_1 = arith.constant 0 : i32
    return %c0_i32, %c0_i32_0 : i32, i32
  }
  func.func @transform_5(%arg0: i32) -> (i32, i32) {
    %c0_i32 = arith.constant 0 : i32
    %c0_i32_0 = arith.constant 0 : i32
    %c0_i32_1 = arith.constant 0 : i32
    return %c0_i32, %c0_i32_0 : i32, i32
  }
  func.func @transform_6(%arg0: i32) -> (i32, i32) {
    %c0_i32 = arith.constant 0 : i32
    %c0_i32_0 = arith.constant 0 : i32
    %c0_i32_1 = arith.constant 0 : i32
    return %c0_i32, %c0_i32_0 : i32, i32
  }
  func.func @transform_7(%arg0: i32) -> (i32, i32, i32) {
    %c0_i32 = arith.constant 0 : i32
    %c0_i32_0 = arith.constant 0 : i32
    %c0_i32_1 = arith.constant 0 : i32
    return %arg0, %c0_i32, %c0_i32_0 : i32, i32, i32
  }
}

</mosaic_0001>

<llo_original>
// kernel: tpu_custom_call.1
$region0: #{tpu_custom_call.1}
  #allocation0 [shape = 'u32[]', space=smem, size = 0x4, offset = 0x4, fixed_abs, tag = 'smem constant byte address 0x4 - core index']
  #allocation1 [shape = 'u32[144,128]{1,0:T(1,128)}', space=vmem, size = 0x12000, scoped, tag = 'internal scratch']
  %s0 = inlined_call_operand.vmem [shape: f32[2,16,256], index: 0, kind: input, shape index: {}]
  %s1 = inlined_call_operand.vmem [shape: bf16[256,64], index: 1, kind: input, shape index: {}]
  %s2 = inlined_call_operand.vmem [shape: f32[1,64], index: 2, kind: input, shape index: {}]
  %s3 = inlined_call_operand.vmem [shape: bf16[192,64], index: 3, kind: input, shape index: {}]
  %s4 = inlined_call_operand.vmem [shape: f32[1,64], index: 4, kind: input, shape index: {}]
  %s5 = inlined_call_operand.vmem [shape: bf16[64,256], index: 5, kind: input, shape index: {}]
  %s6 = inlined_call_operand.vmem [shape: f32[1,256], index: 6, kind: input, shape index: {}]
  %s7 = inlined_call_operand.hbm [shape: f32[2,16,256], index: 7, kind: output, shape index: {}]
  %s8 = sld [smem:[#allocation0]]
  $region38: #{tpu_custom_call.1} parent=0
    _
  %s10 = ssub.s32 1, %s8
  %s11 = scalar_select 0, %s10, %s8
  $region1: #{tpu_custom_call.1} parent=0
    #allocation2 [shape = 'u8[32768]{0}', space=vmem, size = 0x8000, scoped, tag = 'output window, operand 0, single buffered']
    #allocation3 [shape = 's32[1]{0}', space=sflag, size = 0x4, scoped, tag = 'scoped memory for tpu_custom_call.1']
    %12 = vsyncpa [#allocation3], 0
    // Predicated region
    $region2: #{tpu_custom_call.1} parent=1 // pred_check
      _
    $region3: #{tpu_custom_call.1} parent=1 // pred_check_branch
      %14 = sbr.rel (0) target = $region5
    $region4: #{tpu_custom_call.1} parent=1 // pred_region
      _
    $region5: #{tpu_custom_call.1} parent=1 // pred_fallthru
      _
    // Predicated region
    $region6: #{tpu_custom_call.1} parent=1 // pred_check
      _
    $region7: #{tpu_custom_call.1} parent=1 // pred_check_branch
      %16 = sbr.rel (0) target = $region9
    $region8: #{tpu_custom_call.1} parent=1 // pred_region
      _
    $region9: #{tpu_custom_call.1} parent=1 // pred_fallthru
      _
    // Predicated region
    $region10: #{tpu_custom_call.1} parent=1 // pred_check
      _
    $region11: #{tpu_custom_call.1} parent=1 // pred_check_branch
      %18 = sbr.rel (0) target = $region13
    $region12: #{tpu_custom_call.1} parent=1 // pred_region
      _
    $region13: #{tpu_custom_call.1} parent=1 // pred_fallthru
      _
    // Predicated region
    $region14: #{tpu_custom_call.1} parent=1 // pred_check
      _
    $region15: #{tpu_custom_call.1} parent=1 // pred_check_branch
      %20 = sbr.rel (0) target = $region17
    $region16: #{tpu_custom_call.1} parent=1 // pred_region
      _
    $region17: #{tpu_custom_call.1} parent=1 // pred_fallthru
      _
    // Predicated region
    $region18: #{tpu_custom_call.1} parent=1 // pred_check
      _
    $region19: #{tpu_custom_call.1} parent=1 // pred_check_branch
      %22 = sbr.rel (0) target = $region21
    $region20: #{tpu_custom_call.1} parent=1 // pred_region
      _
    $region21: #{tpu_custom_call.1} parent=1 // pred_fallthru
      _
    // Predicated region
    $region22: #{tpu_custom_call.1} parent=1 // pred_check
      _
    $region23: #{tpu_custom_call.1} parent=1 // pred_check_branch
      %24 = sbr.rel (0) target = $region25
    $region24: #{tpu_custom_call.1} parent=1 // pred_region
      _
    $region25: #{tpu_custom_call.1} parent=1 // pred_fallthru
      _
    // Predicated region
    $region26: #{tpu_custom_call.1} parent=1 // pred_check
      _
    $region27: #{tpu_custom_call.1} parent=1 // pred_check_branch
      %26 = sbr.rel (0) target = $region29
    $region28: #{tpu_custom_call.1} parent=1 // pred_region
      _
    $region29: #{tpu_custom_call.1} parent=1 // pred_fallthru
      _
    %v28 = vld [vmem:[%s0] sm:$0xff]
    %v29 = vld [vmem:[%s0 + $0x8] sm:$0xff]
    %v30 = vld [vmem:[%s0 + $0x10] sm:$0xff]
    %v31 = vld [vmem:[%s0 + $0x18] sm:$0xff]
    %v32 = vld [vmem:[%s0 + $0x20] sm:$0xff]
    %v33 = vld [vmem:[%s0 + $0x28] sm:$0xff]
    %v34 = vld [vmem:[%s0 + $0x30] sm:$0xff]
    %v35 = vld [vmem:[%s0 + $0x38] sm:$0xff]
    %v36 = vpack.c.bf16 %v30, %v28
    %v37 = vpack.c.bf16 %v31, %v29
    %v38 = vpack.c.bf16 %v34, %v32
    %v39 = vpack.c.bf16 %v35, %v33
    %v40 = vld [vmem:[%s1] sm:$0xf]
    %v41 = vld [vmem:[%s1 + $0x4] sm:$0xf]
    %v42 = vld [vmem:[%s1 + $0x8] sm:$0xf]
    %v43 = vld [vmem:[%s1 + $0xc] sm:$0xf]
    %v44 = vld [vmem:[%s1 + $0x10] sm:$0xf]
    %v45 = vld [vmem:[%s1 + $0x14] sm:$0xf]
    %v46 = vld [vmem:[%s1 + $0x18] sm:$0xf]
    %v47 = vld [vmem:[%s1 + $0x1c] sm:$0xf]
    %v48 = vld [vmem:[%s1 + $0x20] sm:$0xf]
    %v49 = vld [vmem:[%s1 + $0x24] sm:$0xf]
    %v50 = vld [vmem:[%s1 + $0x28] sm:$0xf]
    %v51 = vld [vmem:[%s1 + $0x2c] sm:$0xf]
    %v52 = vld [vmem:[%s1 + $0x30] sm:$0xf]
    %v53 = vld [vmem:[%s1 + $0x34] sm:$0xf]
    %v54 = vld [vmem:[%s1 + $0x38] sm:$0xf]
    %v55 = vld [vmem:[%s1 + $0x3c] sm:$0xf]
    %v56 = vld [vmem:[%s1 + $0x40] sm:$0xf]
    %v57 = vld [vmem:[%s1 + $0x44] sm:$0xf]
    %v58 = vld [vmem:[%s1 + $0x48] sm:$0xf]
    %v59 = vld [vmem:[%s1 + $0x4c] sm:$0xf]
    %v60 = vld [vmem:[%s1 + $0x50] sm:$0xf]
    %v61 = vld [vmem:[%s1 + $0x54] sm:$0xf]
    %v62 = vld [vmem:[%s1 + $0x58] sm:$0xf]
    %v63 = vld [vmem:[%s1 + $0x5c] sm:$0xf]
    %v64 = vld [vmem:[%s1 + $0x60] sm:$0xf]
    %v65 = vld [vmem:[%s1 + $0x64] sm:$0xf]
    %v66 = vld [vmem:[%s1 + $0x68] sm:$0xf]
    %v67 = vld [vmem:[%s1 + $0x6c] sm:$0xf]
    %v68 = vld [vmem:[%s1 + $0x70] sm:$0xf]
    %v69 = vld [vmem:[%s1 + $0x74] sm:$0xf]
    %v70 = vld [vmem:[%s1 + $0x78] sm:$0xf]
    %v71 = vld [vmem:[%s1 + $0x7c] sm:$0xf]
    %v72 = vld [vmem:[%s2] sm:$0x1]
    %v74 = vlaneseq
    %v75 = vshrl.u32 %v74, 7
    %v76 = vsub.s32 0, %v75
    %v77 = vrot.slane %v72, %v76
    %v111 = vunpack.c.l.b16 %v40
    %v112 = vunpack.c.l.b16 %v41
    %v113 = vunpack.c.l.b16 %v42
    %v114 = vunpack.c.l.b16 %v43
    %v115 = vunpack.c.l.b16 %v44
    %v116 = vunpack.c.l.b16 %v45
    %v117 = vunpack.c.l.b16 %v46
    %v118 = vunpack.c.l.b16 %v47
    %v119 = vunpack.c.l.b16 %v48
    %v120 = vunpack.c.l.b16 %v49
    %v121 = vunpack.c.l.b16 %v50
    %v122 = vunpack.c.l.b16 %v51
    %v123 = vunpack.c.l.b16 %v52
    %v124 = vunpack.c.l.b16 %v53
    %v125 = vunpack.c.l.b16 %v54
    %v126 = vunpack.c.l.b16 %v55
    %v127 = vunpack.c.l.b16 %v56
    %v128 = vunpack.c.l.b16 %v57
    %v129 = vunpack.c.l.b16 %v58
    %v130 = vunpack.c.l.b16 %v59
    %v131 = vunpack.c.l.b16 %v60
    %v132 = vunpack.c.l.b16 %v61
    %v133 = vunpack.c.l.b16 %v62
    %v134 = vunpack.c.l.b16 %v63
    %v135 = vunpack.c.l.b16 %v64
    %v136 = vunpack.c.l.b16 %v65
    %v137 = vunpack.c.l.b16 %v66
    %v138 = vunpack.c.l.b16 %v67
    %v139 = vunpack.c.l.b16 %v68
    %v140 = vunpack.c.l.b16 %v69
    %v141 = vunpack.c.l.b16 %v70
    %v142 = vunpack.c.l.b16 %v71
    %v143 = vpack.c.b16 %v112, %v111
    %v144 = vpack.c.b16 %v114, %v113
    %v145 = vpack.c.b16 %v116, %v115
    %v146 = vpack.c.b16 %v118, %v117
    %v147 = vpack.c.b16 %v120, %v119
    %v148 = vpack.c.b16 %v122, %v121
    %v149 = vpack.c.b16 %v124, %v123
    %v150 = vpack.c.b16 %v126, %v125
    %v151 = vpack.c.b16 %v128, %v127
    %v152 = vpack.c.b16 %v130, %v129
    %v153 = vpack.c.b16 %v132, %v131
    %v154 = vpack.c.b16 %v134, %v133
    %v155 = vpack.c.b16 %v136, %v135
    %v156 = vpack.c.b16 %v138, %v137
    %v157 = vpack.c.b16 %v140, %v139
    %v158 = vpack.c.b16 %v142, %v141
    %175 = vmatprep.subr.bf16.mxu0 0
    %176 = vmatpush1.bf16.msra.mxu0 %v143
    %177 = vmatprep.subr.bf16.mxu0 0
    %178 = vmatpush1.bf16.msra.mxu0 %v144
    %179 = vmatprep.subr.bf16.mxu0 0
    %180 = vmatpush1.bf16.msra.mxu0 %v145
    %181 = vmatprep.subr.bf16.mxu0 0
    %182 = vmatpush1.bf16.msra.mxu0 %v146
    %183 = vmatprep.subr.bf16.mxu0 0
    %184 = vmatpush1.bf16.msra.mxu0 %v147
    %185 = vmatprep.subr.bf16.mxu0 0
    %186 = vmatpush1.bf16.msra.mxu0 %v148
    %187 = vmatprep.subr.bf16.mxu0 0
    %188 = vmatpush1.bf16.msra.mxu0 %v149
    %189 = vmatprep.subr.bf16.mxu0 0
    %190 = vmatpush1.bf16.msra.mxu0 %v150
    %191 = vmatprep.subr.bf16.mxu0 0
    %192 = vmatpush1.bf16.msra.mxu0 %v151
    %193 = vmatprep.subr.bf16.mxu0 0
    %194 = vmatpush1.bf16.msra.mxu0 %v152
    %195 = vmatprep.subr.bf16.mxu0 0
    %196 = vmatpush1.bf16.msra.mxu0 %v153
    %197 = vmatprep.subr.bf16.mxu0 0
    %198 = vmatpush1.bf16.msra.mxu0 %v154
    %199 = vmatprep.subr.bf16.mxu0 0
    %200 = vmatpush1.bf16.msra.mxu0 %v155
    %201 = vmatprep.subr.bf16.mxu0 0
    %202 = vmatpush1.bf16.msra.mxu0 %v156
    %203 = vmatprep.subr.bf16.mxu0 0
    %204 = vmatpush1.bf16.msra.mxu0 %v157
    %205 = vmatprep.subr.bf16.mxu0 0
    %206 = vmatpush1.bf16.msra.mxu0 %v158
    %207 = vmatprep.mubr.bf16.mxu0 %v37
    %208 = vmatmul.mubr.bf16.gmra.mrb[0].mxu0 %v36
    %v209 = vpop.f32.mrb[0].mxu0
    %v210 = vadd.f32 %v77, %v209
    %v211 = vpop.f32.mrb[0].mxu0
    %v212 = vpop.f32.mrb[0].mxu0
    %v213 = vadd.f32 %v77, %v212
    %v214 = vpop.f32.mrb[0].mxu0
    %215 = vmatprep.mubr.bf16.mxu0 %v39
    %216 = vmatmul.mubr.bf16.gmra.mrb[0].mxu0 %v38
    %v217 = vpop.f32.mrb[0].mxu0
    %v218 = vadd.f32 %v77, %v217
    %v219 = vpop.f32.mrb[0].mxu0
    %v220 = vpop.f32.mrb[0].mxu0
    %v221 = vadd.f32 %v77, %v220
    %v222 = vpop.f32.mrb[0].mxu0
    %223 = vdwg.mxu0
    %v224 = vmax.f32 %v210, 0.0
    %v225 = vmax.f32 %v213, 0.0
    %v226 = vmax.f32 %v218, 0.0
    %v227 = vmax.f32 %v221, 0.0
    %v228 = vlaneseq
    %v229 = vshrl.u32 %v228, 7
    %v230 = vadd.s32 %v229, 8
    %vm231 = vcmp.ge.s32.totalorder %v229, 1
    %vm232 = vcmp.ge.s32.totalorder %v230, 1
    %v233 = vrot.slane %v224, 7
    %v234 = vrot.slane %v225, 7
    %v235 = vrot.slane %v226, 7
    %v236 = vrot.slane %v227, 7
    %vm237 = vcmp.lt.s32.totalorder %v229, 1
    %v238 = vsel %vm237, %v235, %v236
    %v239 = vsel %vm237, %v234, %v235
    %v240 = vsel %vm237, %v233, %v234
    %v241 = vsel %vm237, %v236, %v233
    %v242 = vsel %vm231, %v241, 0.0
    %v243 = vsel %vm232, %v240, 0.0
    %v244 = vsel %vm231, %v239, 0.0
    %v245 = vsel %vm232, %v238, 0.0
    %vm246 = vcmp.le.s32.totalorder %v229, 14
    %vm247 = vcmp.le.s32.totalorder %v230, 14
    %v248 = vrot.slane %v224, 1
    %v249 = vrot.slane %v225, 1
    %v250 = vrot.slane %v226, 1
    %v251 = vrot.slane %v227, 1
    %vm252 = vcmp.lt.s32.totalorder %v229, 7
    %v253 = vsel %vm252, %v250, %v251
    %v254 = vsel %vm252, %v249, %v250
    %v255 = vsel %vm252, %v248, %v249
    %v256 = vsel %vm252, %v251, %v248
    %v257 = vsel %vm246, %v255, 0.0
    %v258 = vsel %vm247, %v254, 0.0
    %v259 = vsel %vm246, %v253, 0.0
    %v260 = vsel %vm247, %v256, 0.0
    %265 = vrot.lane.b32.xlu0 %v224, 64
    %v266 = vpop.permute.xlu0 %265
    %267 = vrot.lane.b32.xlu0 %v225, 64
    %v268 = vpop.permute.xlu0 %267
    %269 = vrot.lane.b32.xlu0 %v226, 64
    %v270 = vpop.permute.xlu0 %269
    %271 = vrot.lane.b32.xlu0 %v227, 64
    %v272 = vpop.permute.xlu0 %271
    %vm277 = vcmask 523264
    %v278 = vsel %vm277, %v242, %v266
    %v279 = vsel %vm277, %v243, %v268
    %v280 = vsel %vm277, %v244, %v270
    %v281 = vsel %vm277, %v245, %v272
    %v282 = vpack.c.bf16 %v279, %v278
    %v283 = vpack.c.bf16 %v258, %v257
    %v284 = vpack.c.bf16 %v281, %v280
    %v285 = vpack.c.bf16 %v260, %v259
    %v286 = vld [vmem:[%s3] sm:$0xf]
    %v287 = vld [vmem:[%s3 + $0x4] sm:$0xf]
    %v288 = vld [vmem:[%s3 + $0x8] sm:$0xf]
    %v289 = vld [vmem:[%s3 + $0xc] sm:$0xf]
    %v290 = vld [vmem:[%s3 + $0x10] sm:$0xf]
    %v291 = vld [vmem:[%s3 + $0x14] sm:$0xf]
    %v292 = vld [vmem:[%s3 + $0x18] sm:$0xf]
    %v293 = vld [vmem:[%s3 + $0x1c] sm:$0xf]
    %v294 = vld [vmem:[%s3 + $0x20] sm:$0xf]
    %v295 = vld [vmem:[%s3 + $0x24] sm:$0xf]
    %v296 = vld [vmem:[%s3 + $0x28] sm:$0xf]
    %v297 = vld [vmem:[%s3 + $0x2c] sm:$0xf]
    %v298 = vld [vmem:[%s3 + $0x30] sm:$0xf]
    %v299 = vld [vmem:[%s3 + $0x34] sm:$0xf]
    %v300 = vld [vmem:[%s3 + $0x38] sm:$0xf]
    %v301 = vld [vmem:[%s3 + $0x3c] sm:$0xf]
    %v302 = vld [vmem:[%s3 + $0x40] sm:$0xf]
    %v303 = vld [vmem:[%s3 + $0x44] sm:$0xf]
    %v304 = vld [vmem:[%s3 + $0x48] sm:$0xf]
    %v305 = vld [vmem:[%s3 + $0x4c] sm:$0xf]
    %v306 = vld [vmem:[%s3 + $0x50] sm:$0xf]
    %v307 = vld [vmem:[%s3 + $0x54] sm:$0xf]
    %v308 = vld [vmem:[%s3 + $0x58] sm:$0xf]
    %v309 = vld [vmem:[%s3 + $0x5c] sm:$0xf]
    %v310 = vld [vmem:[%s4] sm:$0x1]
    %v312 = vlaneseq
    %v313 = vshrl.u32 %v312, 7
    %v314 = vsub.s32 0, %v313
    %v315 = vrot.slane %v310, %v314
    %v341 = vunpack.c.l.b16 %v286
    %v342 = vunpack.c.l.b16 %v287
    %v343 = vunpack.c.l.b16 %v288
    %v344 = vunpack.c.l.b16 %v289
    %v345 = vunpack.c.l.b16 %v290
    %v346 = vunpack.c.l.b16 %v291
    %v347 = vunpack.c.l.b16 %v292
    %v348 = vunpack.c.l.b16 %v293
    %v349 = vunpack.c.l.b16 %v294
    %v350 = vunpack.c.l.b16 %v295
    %v351 = vunpack.c.l.b16 %v296
    %v352 = vunpack.c.l.b16 %v297
    %v353 = vunpack.c.l.b16 %v298
    %v354 = vunpack.c.l.b16 %v299
    %v355 = vunpack.c.l.b16 %v300
    %v356 = vunpack.c.l.b16 %v301
    %v357 = vunpack.c.l.b16 %v302
    %v358 = vunpack.c.l.b16 %v303
    %v359 = vunpack.c.l.b16 %v304
    %v360 = vunpack.c.l.b16 %v305
    %v361 = vunpack.c.l.b16 %v306
    %v362 = vunpack.c.l.b16 %v307
    %v363 = vunpack.c.l.b16 %v308
    %v364 = vunpack.c.l.b16 %v309
    %v365 = vpack.c.b16 %v342, %v341
    %v366 = vpack.c.b16 %v344, %v343
    %v367 = vpack.c.b16 %v346, %v345
    %v368 = vpack.c.b16 %v348, %v347
    %v369 = vpack.c.b16 %v350, %v349
    %v370 = vpack.c.b16 %v352, %v351
    %v371 = vpack.c.b16 %v354, %v353
    %v372 = vpack.c.b16 %v356, %v355
    %v373 = vpack.c.b16 %v358, %v357
    %v374 = vpack.c.b16 %v360, %v359
    %v375 = vpack.c.b16 %v362, %v361
    %v376 = vpack.c.b16 %v364, %v363
    %v390 = vsel %vm277, %v283, 0
    %v393 = vsel %vm277, %v285, 0
    %395 = vmatprep.subr.bf16.mxu0 0
    %396 = vmatpush1.bf16.msra.mxu0 %v365
    %397 = vmatprep.subr.bf16.mxu0 0
    %398 = vmatpush1.bf16.msra.mxu0 %v366
    %399 = vmatprep.subr.bf16.mxu0 0
    %400 = vmatpush1.bf16.msra.mxu0 %v367
    %401 = vmatprep.subr.bf16.mxu0 0
    %402 = vmatpush1.bf16.msra.mxu0 %v368
    %403 = vmatprep.subr.bf16.mxu0 0
    %404 = vmatpush1.bf16.msra.mxu0 %v369
    %405 = vmatprep.subr.bf16.mxu0 0
    %406 = vmatpush1.bf16.msra.mxu0 %v370
    %407 = vmatprep.subr.bf16.mxu0 0
    %408 = vmatpush1.bf16.msra.mxu0 %v371
    %409 = vmatprep.subr.bf16.mxu0 0
    %410 = vmatpush1.bf16.msra.mxu0 %v372
    %411 = vmatprep.subr.bf16.mxu0 0
    %412 = vmatpush1.bf16.msra.mxu0 %v373
    %413 = vmatprep.subr.bf16.mxu0 0
    %414 = vmatpush1.bf16.msra.mxu0 %v374
    %415 = vmatprep.subr.bf16.mxu0 0
    %416 = vmatpush1.bf16.msra.mxu0 %v375
    %417 = vmatprep.subr.bf16.mxu0 0
    %418 = vmatpush1.bf16.msra.mxu0 %v376
    %419 = vmatprep.subr.bf16.mxu0 0
    %420 = vmatpush1.bf16.msra.mxu0 0
    %421 = vmatprep.subr.bf16.mxu0 0
    %422 = vmatpush1.bf16.msra.mxu0 0
    %423 = vmatprep.subr.bf16.mxu0 0
    %424 = vmatpush1.bf16.msra.mxu0 0
    %425 = vmatprep.subr.bf16.mxu0 0
    %426 = vmatpush1.bf16.msra.mxu0 0
    %427 = vmatprep.mubr.bf16.mxu0 %v390
    %428 = vmatmul.mubr.bf16.gmra.mrb[0].mxu0 %v282
    %v429 = vpop.f32.mrb[0].mxu0
    %v430 = vadd.f32 %v315, %v429
    %v431 = vpop.f32.mrb[0].mxu0
    %v432 = vpop.f32.mrb[0].mxu0
    %v433 = vadd.f32 %v315, %v432
    %v434 = vpop.f32.mrb[0].mxu0
    %435 = vmatprep.mubr.bf16.mxu0 %v393
    %436 = vmatmul.mubr.bf16.gmra.mrb[0].mxu0 %v284
    %v437 = vpop.f32.mrb[0].mxu0
    %v438 = vadd.f32 %v315, %v437
    %v439 = vpop.f32.mrb[0].mxu0
    %v440 = vpop.f32.mrb[0].mxu0
    %v441 = vadd.f32 %v315, %v440
    %v442 = vpop.f32.mrb[0].mxu0
    %443 = vdwg.mxu0
    %v444 = vmax.f32 %v430, 0.0
    %v445 = vmax.f32 %v433, 0.0
    %v446 = vmax.f32 %v438, 0.0
    %v447 = vmax.f32 %v441, 0.0
    %v448 = vpack.c.bf16 %v445, %v444
    %v449 = vpack.c.bf16 %v447, %v446
    %v450 = vld [vmem:[%s5] sm:$0xff]
    %v451 = vld [vmem:[%s5 + $0x8] sm:$0xff]
    %v452 = vld [vmem:[%s5 + $0x10] sm:$0xff]
    %v453 = vld [vmem:[%s5 + $0x18] sm:$0xff]
    %v454 = vld [vmem:[%s5 + $0x20] sm:$0xff]
    %v455 = vld [vmem:[%s5 + $0x28] sm:$0xff]
    %v456 = vld [vmem:[%s5 + $0x30] sm:$0xff]
    %v457 = vld [vmem:[%s5 + $0x38] sm:$0xff]
    %v458 = vld [vmem:[%s6] sm:$0x3]
    %v460 = vlaneseq
    %v461 = vshrl.u32 %v460, 7
    %v462 = vsub.s32 0, %v461
    %v463 = vrot.slane %v458, %v462
    %v464 = vlaneseq
    %v465 = vshrl.u32 %v464, 7
    %v466 = vsub.s32 1, %v465
    %v467 = vrot.slane %v458, %v466
    %v478 = vunpack.c.l.b16 %v450
    %v479 = vunpack.c.h.b16 %v450
    %v480 = vunpack.c.l.b16 %v451
    %v481 = vunpack.c.h.b16 %v451
    %v482 = vunpack.c.l.b16 %v452
    %v483 = vunpack.c.h.b16 %v452
    %v484 = vunpack.c.l.b16 %v453
    %v485 = vunpack.c.h.b16 %v453
    %v486 = vunpack.c.l.b16 %v454
    %v487 = vunpack.c.h.b16 %v454
    %v488 = vunpack.c.l.b16 %v455
    %v489 = vunpack.c.h.b16 %v455
    %v490 = vunpack.c.l.b16 %v456
    %v491 = vunpack.c.h.b16 %v456
    %v492 = vunpack.c.l.b16 %v457
    %v493 = vunpack.c.h.b16 %v457
    %v494 = vpack.c.b16 %v480, %v478
    %v495 = vpack.c.b16 %v481, %v479
    %v496 = vpack.c.b16 %v484, %v482
    %v497 = vpack.c.b16 %v485, %v483
    %v498 = vpack.c.b16 %v488, %v486
    %v499 = vpack.c.b16 %v489, %v487
    %v500 = vpack.c.b16 %v492, %v490
    %v501 = vpack.c.b16 %v493, %v491
    %v511 = vsel %vm277, %v448, 0
    %v514 = vsel %vm277, %v449, 0
    %516 = vmatprep.subr.bf16.mxu0 %v495
    %517 = vmatpush1.bf16.msra.mxu0 %v494
    %518 = vmatprep.subr.bf16.mxu0 %v497
    %519 = vmatpush1.bf16.msra.mxu0 %v496
    %520 = vmatprep.subr.bf16.mxu0 %v499
    %521 = vmatpush1.bf16.msra.mxu0 %v498
    %522 = vmatprep.subr.bf16.mxu0 %v501
    %523 = vmatpush1.bf16.msra.mxu0 %v500
    %524 = vmatprep.subr.bf16.mxu0 0
    %525 = vmatpush1.bf16.msra.mxu0 0
    %526 = vmatprep.subr.bf16.mxu0 0
    %527 = vmatpush1.bf16.msra.mxu0 0
    %528 = vmatprep.subr.bf16.mxu0 0
    %529 = vmatpush1.bf16.msra.mxu0 0
    %530 = vmatprep.subr.bf16.mxu0 0
    %531 = vmatpush1.bf16.msra.mxu0 0
    %532 = vmatprep.subr.bf16.mxu0 0
    %533 = vmatpush1.bf16.msra.mxu0 0
    %534 = vmatprep.subr.bf16.mxu0 0
    %535 = vmatpush1.bf16.msra.mxu0 0
    %536 = vmatprep.subr.bf16.mxu0 0
    %537 = vmatpush1.bf16.msra.mxu0 0
    %538 = vmatprep.subr.bf16.mxu0 0
    %539 = vmatpush1.bf16.msra.mxu0 0
    %540 = vmatprep.subr.bf16.mxu0 0
    %541 = vmatpush1.bf16.msra.mxu0 0
    %542 = vmatprep.subr.bf16.mxu0 0
    %543 = vmatpush1.bf16.msra.mxu0 0
    %544 = vmatprep.subr.bf16.mxu0 0
    %545 = vmatpush1.bf16.msra.mxu0 0
    %546 = vmatprep.subr.bf16.mxu0 0
    %547 = vmatpush1.bf16.msra.mxu0 0
    %548 = vmatprep.mubr.bf16.mxu0 0
    %549 = vmatmul.mubr.bf16.gmra.mrb[0].mxu0 %v511
    %v550 = vpop.f32.mrb[0].mxu0
    %v551 = vadd.f32 %v463, %v550
    %v552 = vpop.f32.mrb[0].mxu0
    %v553 = vadd.f32 %v467, %v552
    %v554 = vpop.f32.mrb[0].mxu0
    %v555 = vadd.f32 %v463, %v554
    %v556 = vpop.f32.mrb[0].mxu0
    %v557 = vadd.f32 %v467, %v556
    %558 = vmatprep.mubr.bf16.mxu0 0
    %559 = vmatmul.mubr.bf16.gmra.mrb[0].mxu0 %v514
    %v560 = vpop.f32.mrb[0].mxu0
    %v561 = vadd.f32 %v463, %v560
    %v562 = vpop.f32.mrb[0].mxu0
    %v563 = vadd.f32 %v467, %v562
    %v564 = vpop.f32.mrb[0].mxu0
    %v565 = vadd.f32 %v463, %v564
    %v566 = vpop.f32.mrb[0].mxu0
    %v567 = vadd.f32 %v467, %v566
    %568 = vdwg.mxu0
    %v569 = vadd.f32 %v551, %v28
    %v570 = vadd.f32 %v553, %v29
    %v571 = vadd.f32 %v555, %v30
    %v572 = vadd.f32 %v557, %v31
    %v573 = vadd.f32 %v561, %v32
    %v574 = vadd.f32 %v563, %v33
    %v575 = vadd.f32 %v565, %v34
    %v576 = vadd.f32 %v567, %v35
    %v577 = vmax.f32 %v569, 0.0
    %v578 = vmax.f32 %v570, 0.0
    %v579 = vmax.f32 %v571, 0.0
    %v580 = vmax.f32 %v572, 0.0
    %v581 = vmax.f32 %v573, 0.0
    %v582 = vmax.f32 %v574, 0.0
    %v583 = vmax.f32 %v575, 0.0
    %v584 = vmax.f32 %v576, 0.0
    %585 = vst [vmem:[#allocation2] sm:$0xff] %v577
    %586 = vst [vmem:[#allocation2 + $0x8] sm:$0xff] %v578
    %587 = vst [vmem:[#allocation2 + $0x10] sm:$0xff] %v579
    %588 = vst [vmem:[#allocation2 + $0x18] sm:$0xff] %v580
    %589 = vst [vmem:[#allocation2 + $0x20] sm:$0xff] %v581
    %590 = vst [vmem:[#allocation2 + $0x28] sm:$0xff] %v582
    %591 = vst [vmem:[#allocation2 + $0x30] sm:$0xff] %v583
    %592 = vst [vmem:[#allocation2 + $0x38] sm:$0xff] %v584
    // Predicated region
    $region30: #{tpu_custom_call.1} parent=1 // pred_check
      _
    $region31: #{tpu_custom_call.1} parent=1 // pred_check_branch
      %594 = sbr.rel (0) target = $region33
    $region32: #{tpu_custom_call.1} parent=1 // pred_region
      %s596 = ssub.s32 1024, 1024
      %597 = vsyncadd [#allocation3], %s596
      %s598 = sshll.u32 [#allocation2], 4
      %s599 = int_to_ptr.vmem [resolvable:$true] %s598
      %604 = dma.vmem_to_hbm [thread:$0]  %s599, 1024, %s7, [#allocation3], 256, 256, 16
    $region33: #{tpu_custom_call.1} parent=1 // pred_fallthru
      _
    // Predicated region
    $region34: #{tpu_custom_call.1} parent=1 // pred_check
      _
    $region35: #{tpu_custom_call.1} parent=1 // pred_check_branch
      %606 = sbr.rel (0) target = $region37
    $region36: #{tpu_custom_call.1} parent=1 // pred_region
      %607 = dma.done [#allocation3], 1024
    $region37: #{tpu_custom_call.1} parent=1 // pred_fallthru
      _
    %608 = vsyncpa [#allocation3], 1

</llo_original>
